<compile_context>
chip_gen: v7x
topology: tpu7x:2x2x1
jax: 0.10.0
libtpu: 0.0.40
codegen_flags: <defaults>
</compile_context>

<pallas_src>
import functools

import jax
import jax.numpy as jnp
from jax import lax
from jax.experimental import pallas as pl
from jax.experimental.pallas import tpu as pltpu

_LANES = 128


def _chip_config():
    """Returns (num_tensorcores, vmem_limit_bytes_or_None, target_block_bytes)."""
    try:
        kind = jax.devices()[0].device_kind.lower()
    except Exception:  # pragma: no cover - defensive
        kind = ""
    if "v7" in kind:
        # 2 TCs, 64 MiB physical VMEM per TC, ~3.2 TB/s HBM.
        return 2, 48 * 1024 * 1024, 8 * 1024 * 1024
    if "v6" in kind:
        # 1 TC, 128 MiB VMEM (32 MiB default scoped), ~1.4 TB/s HBM.
        return 1, 40 * 1024 * 1024, 4 * 1024 * 1024
    # v5e / older / unknown: stay under the 16 MiB default scoped VMEM.
    return 1, None, 2 * 1024 * 1024


def _mse_kernel(x_ref, y_ref, o_ref, *, valid_rows, chunk_rows, use_mask):
    c = pl.program_id(0)          # TensorCore / partial-sum index
    s = pl.program_id(1)          # streaming step along rows ("arbitrary")
    steps = pl.num_programs(1)

    # Output block (8, 128) is resident across the `s` axis (its index_map
    # ignores `s`): zero it once, then accumulate directly into it.
    @pl.when(s == 0)
    def _():
        o_ref[...] = jnp.zeros_like(o_ref)

    block_rows, lanes = x_ref.shape
    row_offset = (c * steps + s) * block_rows   # unclamped logical row offset

    def chunk(start):
        xs = x_ref[pl.ds(start, chunk_rows), :].astype(jnp.float32)
        ys = y_ref[pl.ds(start, chunk_rows), :].astype(jnp.float32)
        d = xs - ys
        if use_mask:
            rid = (row_offset + start
                   + lax.broadcasted_iota(jnp.int32, (chunk_rows, 1), 0))
            d = jnp.where(rid < valid_rows, d, 0.0)
        sq = d * d
        if chunk_rows == 8:
            return sq
        return jnp.sum(sq.reshape(chunk_rows // 8, 8, lanes), axis=0)

    n_chunks = block_rows // chunk_rows          # exact by construction
    acc = jnp.zeros((8, lanes), jnp.float32)
    if n_chunks <= 16:
        for i in range(n_chunks):
            acc = acc + chunk(i * chunk_rows)
    else:
        acc = lax.fori_loop(
            0, n_chunks,
            lambda i, a: a + chunk(pl.multiple_of(i * chunk_rows, chunk_rows)),
            acc, unroll=8)

    o_ref[...] += acc


def mse_loss(x, y):
    """Equivalent of torch.mean((x - y) ** 2) -> scalar float32."""
    assert x.shape == y.shape, "x and y must have identical shapes"
    n_elems = x.size
    xf = x.reshape(-1)
    yf = y.reshape(-1)

    itemsize = jnp.dtype(x.dtype).itemsize
    # Sublane packing of the input dtype: 8 rows (32-bit), 16 (bf16), 32 (int8).
    chunk_rows = 8 * max(1, 4 // itemsize)
    align_elems = chunk_rows * _LANES

    ncores_hw, vmem_limit, target_block_bytes = _chip_config()

    # Aligned prefix goes through the kernel via a zero-copy reshape; the tiny
    # (< chunk_rows*128 element) tail is reduced with plain jnp instead of
    # paying a full jnp.pad copy of both inputs.
    n_main = (n_elems // align_elems) * align_elems
    if n_main == 0:
        d = xf.astype(jnp.float32) - yf.astype(jnp.float32)
        return jnp.sum(d * d) / jnp.float32(n_elems)

    if n_main != n_elems:
        dt = xf[n_main:].astype(jnp.float32) - yf[n_main:].astype(jnp.float32)
        tail_sum = jnp.sum(dt * dt)
        xf = xf[:n_main]
        yf = yf[:n_main]
    else:
        tail_sum = jnp.float32(0.0)

    rows = n_main // _LANES                       # multiple of chunk_rows
    x2d = xf.reshape(rows, _LANES)
    y2d = yf.reshape(rows, _LANES)

    # Per-step block: as many rows as the per-generation byte target allows,
    # kept a multiple of the dtype's sublane packing.
    row_bytes = _LANES * itemsize
    max_rows = max(chunk_rows,
                   (target_block_bytes // row_bytes) // chunk_rows * chunk_rows)
    block_rows = min(rows, max_rows)

    total_blocks = pl.cdiv(rows, block_rows)
    # Split across both TensorCores only on v7x; on single-TC chips the extra
    # axis would just be a serial loop plus duplicated edge work.
    ncores = 2 if (ncores_hw == 2 and total_blocks >= 2) else 1
    steps = pl.cdiv(total_blocks, ncores)

    # Mask only when the grid can touch rows past the end (ragged last block or
    # a duplicated clamped block); exact cover pays no per-step mask at all.
    use_mask = (ncores * steps * block_rows) != rows

    def in_map(c, s):
        # Clamp so the DMA never reads an out-of-range block; the in-kernel row
        # mask (based on the unclamped index) zeroes any duplicated work.
        return (jnp.minimum(c * steps + s, total_blocks - 1), 0)

    kernel = functools.partial(
        _mse_kernel, valid_rows=rows, chunk_rows=chunk_rows, use_mask=use_mask)

    if ncores == 2:
        semantics = (pltpu.CORE_PARALLEL, pltpu.ARBITRARY)
    else:
        semantics = (pltpu.ARBITRARY, pltpu.ARBITRARY)

    cost = pl.CostEstimate(
        flops=3 * n_main,
        transcendentals=0,
        bytes_accessed=2 * n_main * itemsize + ncores * 8 * _LANES * 4,
    )

    partials = pl.pallas_call(
        kernel,
        out_shape=jax.ShapeDtypeStruct((ncores * 8, _LANES), jnp.float32),
        grid_spec=pltpu.PrefetchScalarGridSpec(
            num_scalar_prefetch=0,
            grid=(ncores, steps),
            in_specs=[
                pl.BlockSpec((block_rows, _LANES), in_map),
                pl.BlockSpec((block_rows, _LANES), in_map),
            ],
            out_specs=pl.BlockSpec((8, _LANES), lambda c, s: (c, 0)),
        ),
        compiler_params=pltpu.CompilerParams(
            dimension_semantics=semantics,
            vmem_limit_bytes=vmem_limit,
        ),
        cost_estimate=cost,
    )(x2d, y2d)

    total = jnp.sum(partials) + tail_sum
    return total * jnp.float32(1.0 / n_elems)


if __name__ == "__main__":
    key = jax.random.PRNGKey(0)
    kx, ky = jax.random.split(key)
    x = jax.random.normal(kx, (2, 4, 16, 16), dtype=jnp.float32)
    y = jax.random.normal(ky, (2, 4, 16, 16), dtype=jnp.float32)

    loss = mse_loss(x, y)
    jax.block_until_ready(loss)

    ref = jnp.mean((x - y) ** 2)
    assert jnp.allclose(loss, ref, rtol=1e-6, atol=1e-6), (loss, ref)
    print("KERNEL_OK")
</pallas_src>

<mosaic_0001>
module attributes {stable_mosaic.version = 11 : i64} {
  func.func @_mse_kernel(%arg0: i32, %arg1: i32, %arg2: memref<16x128xf32, #tpu.memory_space<vmem>>, %arg3: memref<16x128xf32, #tpu.memory_space<vmem>>, %arg4: memref<8x128xf32, #tpu.memory_space<vmem>>) attributes {dimension_semantics = [#tpu.dimension_semantics<arbitrary>, #tpu.dimension_semantics<arbitrary>], iteration_bounds = array<i64: 1, 1>, scalar_prefetch = 0 : i64, scratch_operands = 0 : i64, tpu.core_type = #tpu.core_type<tc>, window_params = [{transform_indices = @transform_0, window_bounds = array<i64: 16, 128>}, {transform_indices = @transform_1, window_bounds = array<i64: 16, 128>}, {transform_indices = @transform_2, window_bounds = array<i64: 8, 128>}]} {
    %c0_i32 = arith.constant 0 : i32
    %0 = arith.cmpi eq, %arg1, %c0_i32 : i32
    %1 = arith.extui %0 : i1 to i32
    %c0_i32_0 = arith.constant 0 : i32
    %2 = arith.cmpi ne, %1, %c0_i32_0 : i32
    scf.if %2 {
      %cst_11 = arith.constant 0.000000e+00 : f32
      %17 = vector.broadcast %cst_11 : f32 to vector<8x128xf32>
      %c0_12 = arith.constant 0 : index
      %c0_13 = arith.constant 0 : index
      %18 = vector.load %arg4[%c0_12, %c0_13] : memref<8x128xf32, #tpu.memory_space<vmem>>, vector<8x128xf32>
      tpu.vector_store %arg4[%c0_12, %c0_13], %17 {strides = array<i32>} : memref<8x128xf32, #tpu.memory_space<vmem>>, vector<8x128xf32>,
    } else {
    }
    %cst = arith.constant 0.000000e+00 : f32
    %3 = vector.broadcast %cst : f32 to vector<8x128xf32>
    %c0 = arith.constant 0 : index
    %c0_1 = arith.constant 0 : index
    %4 = vector.load %arg2[%c0, %c0_1] : memref<16x128xf32, #tpu.memory_space<vmem>>, vector<8x128xf32>
    %c0_2 = arith.constant 0 : index
    %c0_3 = arith.constant 0 : index
    %5 = vector.load %arg3[%c0_2, %c0_3] : memref<16x128xf32, #tpu.memory_space<vmem>>, vector<8x128xf32>
    %6 = arith.subf %4, %5 : vector<8x128xf32>
    %7 = arith.mulf %6, %6 : vector<8x128xf32>
    %8 = arith.addf %3, %7 : vector<8x128xf32>
    %c8 = arith.constant 8 : index
    %c0_4 = arith.constant 0 : index
    %9 = vector.load %arg2[%c8, %c0_4] : memref<16x128xf32, #tpu.memory_space<vmem>>, vector<8x128xf32>
    %c8_5 = arith.constant 8 : index
    %c0_6 = arith.constant 0 : index
    %10 = vector.load %arg3[%c8_5, %c0_6] : memref<16x128xf32, #tpu.memory_space<vmem>>, vector<8x128xf32>
    %11 = arith.subf %9, %10 : vector<8x128xf32>
    %12 = arith.mulf %11, %11 : vector<8x128xf32>
    %13 = arith.addf %8, %12 : vector<8x128xf32>
    %c0_7 = arith.constant 0 : index
    %c0_8 = arith.constant 0 : index
    %14 = vector.load %arg4[%c0_7, %c0_8] : memref<8x128xf32, #tpu.memory_space<vmem>>, vector<8x128xf32>
    %15 = arith.addf %14, %13 : vector<8x128xf32>
    %c0_9 = arith.constant 0 : index
    %c0_10 = arith.constant 0 : index
    %16 = vector.load %arg4[%c0_9, %c0_10] : memref<8x128xf32, #tpu.memory_space<vmem>>, vector<8x128xf32>
    tpu.vector_store %arg4[%c0_9, %c0_10], %15 {strides = array<i32>} : memref<8x128xf32, #tpu.memory_space<vmem>>, vector<8x128xf32>,
    return
  }
  func.func @transform_0(%arg0: i32, %arg1: i32) -> (i32, i32) {
    %c1_i32 = arith.constant 1 : i32
    %0 = arith.muli %arg0, %c1_i32 : i32
    %1 = arith.addi %0, %arg1 : i32
    %c0_i32 = arith.constant 0 : i32
    %2 = arith.minsi %1, %c0_i32 : i32
    %c0_i32_0 = arith.constant 0 : i32
    %c0_i32_1 = arith.constant 0 : i32
    return %2, %c0_i32_0 : i32, i32
  }
  func.func @transform_1(%arg0: i32, %arg1: i32) -> (i32, i32) {
    %c1_i32 = arith.constant 1 : i32
    %0 = arith.muli %arg0, %c1_i32 : i32
    %1 = arith.addi %0, %arg1 : i32
    %c0_i32 = arith.constant 0 : i32
    %2 = arith.minsi %1, %c0_i32 : i32
    %c0_i32_0 = arith.constant 0 : i32
    %c0_i32_1 = arith.constant 0 : i32
    return %2, %c0_i32_0 : i32, i32
  }
  func.func @transform_2(%arg0: i32, %arg1: i32) -> (i32, i32) {
    %c0_i32 = arith.constant 0 : i32
    %c0_i32_0 = arith.constant 0 : i32
    return %arg0, %c0_i32 : i32, i32
  }
}

</mosaic_0001>

<llo_original>
// kernel: tpu_custom_call.1
$region0: #{tpu_custom_call.1}
  #allocation0 [shape = 'u32[]', space=smem, size = 0x4, offset = 0x4, fixed_abs, tag = 'smem constant byte address 0x4 - core index']
  #allocation1 [shape = 'u32[144,128]{1,0:T(1,128)}', space=vmem, size = 0x12000, scoped, tag = 'internal scratch']
  %s0 = inlined_call_operand.hbm [shape: f32[16,128], index: 0, kind: input, shape index: {}]
  %s1 = inlined_call_operand.hbm [shape: f32[16,128], index: 1, kind: input, shape index: {}]
  %s2 = inlined_call_operand.hbm [shape: f32[8,128], index: 2, kind: output, shape index: {}]
  %s3 = sld [smem:[#allocation0]]
  $region30: #{tpu_custom_call.1} parent=0
    _
  %s5 = ssub.s32 1, %s3
  %s6 = scalar_select 0, %s5, %s3
  $region1: #{tpu_custom_call.1} parent=0
    #allocation2 [shape = 'u8[8192]{0}', space=vmem, size = 0x2000, scoped, tag = 'input window, operand 0, single buffered']
    #allocation3 [shape = 's32[1]{0}', space=sflag, size = 0x4, scoped, tag = 'scoped memory for tpu_custom_call.1']
    #allocation4 [shape = 's32[1]{0}', space=sflag, size = 0x4, scoped, tag = 'scoped memory for tpu_custom_call.1']
    #allocation5 [shape = 'u8[8192]{0}', space=vmem, size = 0x2000, scoped, tag = 'input window, operand 1, single buffered']
    #allocation6 [shape = 's32[1]{0}', space=sflag, size = 0x4, scoped, tag = 'scoped memory for tpu_custom_call.1']
    #allocation7 [shape = 'u8[4096]{0}', space=vmem, size = 0x1000, scoped, tag = 'output window, operand 0, single buffered']
    %7 = vsyncpa [#allocation3], 0
    %8 = vsyncpa [#allocation6], 0
    %9 = vsyncpa [#allocation4], 0
    // Predicated region
    $region2: #{tpu_custom_call.1} parent=1 // pred_check
      _
    $region3: #{tpu_custom_call.1} parent=1 // pred_check_branch
      %11 = sbr.rel (0) target = $region5
    $region4: #{tpu_custom_call.1} parent=1 // pred_region
      %s12 = sadd.s32 0, 0
      %p13 = scmp.lt.s32.totalorder %s12, 0
      %s14 = scalar_select %p13, %s12, 0
      %s15 = smul.u32 2, %s14
      %s17 = ssub.s32 256, 256
      %18 = vsyncadd [#allocation3], %s17
      %s19 = smul.addr %s15, 128
      %s20 = scalar_lea.hbm %s0, %s19
      %s21 = sshll.u32 [#allocation2], 4
      %s22 = int_to_ptr.vmem [resolvable:$true] %s21
      %27 = dma.hbm_to_vmem [thread:$0]  %s20, 256, %s22, [#allocation3], 128, 128, 8
    $region5: #{tpu_custom_call.1} parent=1 // pred_fallthru
      _
    // Predicated region
    $region6: #{tpu_custom_call.1} parent=1 // pred_check
      _
    $region7: #{tpu_custom_call.1} parent=1 // pred_check_branch
      %29 = sbr.rel (0) target = $region9
    $region8: #{tpu_custom_call.1} parent=1 // pred_region
      %s30 = sadd.s32 0, 0
      %p31 = scmp.lt.s32.totalorder %s30, 0
      %s32 = scalar_select %p31, %s30, 0
      %s33 = smul.u32 2, %s32
      %s35 = ssub.s32 256, 256
      %36 = vsyncadd [#allocation6], %s35
      %s37 = smul.addr %s33, 128
      %s38 = scalar_lea.hbm %s1, %s37
      %s39 = sshll.u32 [#allocation5], 4
      %s40 = int_to_ptr.vmem [resolvable:$true] %s39
      %45 = dma.hbm_to_vmem [thread:$0]  %s38, 256, %s40, [#allocation6], 128, 128, 8
    $region9: #{tpu_custom_call.1} parent=1 // pred_fallthru
      _
    // Predicated region
    $region10: #{tpu_custom_call.1} parent=1 // pred_check
      _
    $region11: #{tpu_custom_call.1} parent=1 // pred_check_branch
      %47 = sbr.rel (0) target = $region13
    $region12: #{tpu_custom_call.1} parent=1 // pred_region
      %48 = dma.done [#allocation3], 256
    $region13: #{tpu_custom_call.1} parent=1 // pred_fallthru
      _
    // Predicated region
    $region14: #{tpu_custom_call.1} parent=1 // pred_check
      _
    $region15: #{tpu_custom_call.1} parent=1 // pred_check_branch
      %50 = sbr.rel (0) target = $region17
    $region16: #{tpu_custom_call.1} parent=1 // pred_region
      %51 = dma.done [#allocation6], 256
    $region17: #{tpu_custom_call.1} parent=1 // pred_fallthru
      _
    %s52 = sadd.s32 0, 0
    %p53 = scmp.lt.s32.totalorder %s52, 0
    %s54 = scalar_select %p53, %s52, 0
    %s55 = smul.u32 2, %s54
    %s56 = sadd.s32 0, 0
    %p57 = scmp.lt.s32.totalorder %s56, 0
    %s58 = scalar_select %p57, %s56, 0
    %s59 = smul.u32 2, %s58
    %p60 = scmp.eq.s32.totalorder 0, 0
    // Predicated region
    $region18: #{tpu_custom_call.1} parent=1 // pred_check
      %p61 = pneg %p60
    $region19: #{tpu_custom_call.1} parent=1 // pred_check_branch
      %63 = sbr.rel (%p61) target = $region21
    $region20: #{tpu_custom_call.1} parent=1 // pred_region
      %64 = vst [vmem:[#allocation7] sm:$0xff] 0.0
    $region21: #{tpu_custom_call.1} parent=1 // pred_fallthru
      _
    %v65 = vld [vmem:[#allocation2] sm:$0xff]
    %v66 = vld [vmem:[#allocation5] sm:$0xff]
    %v67 = vsub.f32 %v65, %v66
    %v68 = vmul.f32 %v67, %v67
    %v69 = vadd.f32 %v68, 0.0
    %v70 = vld [vmem:[#allocation2 + $0x8] sm:$0xff]
    %v71 = vld [vmem:[#allocation5 + $0x8] sm:$0xff]
    %v72 = vsub.f32 %v70, %v71
    %v73 = vmul.f32 %v72, %v72
    %v74 = vadd.f32 %v69, %v73
    %v75 = vld [vmem:[#allocation7] sm:$0xff]
    %v76 = vadd.f32 %v75, %v74
    %77 = vst [vmem:[#allocation7] sm:$0xff] %v76
    // Predicated region
    $region22: #{tpu_custom_call.1} parent=1 // pred_check
      _
    $region23: #{tpu_custom_call.1} parent=1 // pred_check_branch
      %79 = sbr.rel (0) target = $region25
    $region24: #{tpu_custom_call.1} parent=1 // pred_region
      %s81 = ssub.s32 128, 128
      %82 = vsyncadd [#allocation4], %s81
      %s84 = sshll.u32 [#allocation7], 4
      %s85 = int_to_ptr.vmem [resolvable:$true] %s84
      %87 = dma.vmem_to_hbm [thread:$0]  %s85, 128, %s2, [#allocation4]
    $region25: #{tpu_custom_call.1} parent=1 // pred_fallthru
      _
    // Predicated region
    $region26: #{tpu_custom_call.1} parent=1 // pred_check
      _
    $region27: #{tpu_custom_call.1} parent=1 // pred_check_branch
      %89 = sbr.rel (0) target = $region29
    $region28: #{tpu_custom_call.1} parent=1 // pred_region
      %90 = dma.done [#allocation4], 128
    $region29: #{tpu_custom_call.1} parent=1 // pred_fallthru
      _
    %91 = vsyncpa [#allocation3], 1
    %92 = vsyncpa [#allocation6], 1
    %93 = vsyncpa [#allocation4], 1

</llo_original>
